<compile_context>
chip_gen: v5e
topology: v5e:2x2
jax: 0.10.0
libtpu: 0.0.40
codegen_flags: <defaults>
</compile_context>

<pallas_src>
import math
import jax
import jax.numpy as jnp
from jax.experimental import pallas as pl
from jax.experimental.pallas import tpu as pltpu


def _round_up(x, m):
    return ((x + m - 1) // m) * m


def _choose_batch_tile(B, batch_tile):
    """Pick the per-step row tile.

    - multiple of 16 (bf16 sublane tiling)
    - at least 2 grid steps whenever B > 16 (keeps both v7x TensorCores busy)
    - capped at `batch_tile` for large B
    """
    if B <= 16:
        return 16
    half = _round_up((B + 1) // 2, 16)
    return min(batch_tile, half)


def actor_kernel(x_ref, w1_ref, b1_ref, w2_ref, b2_ref, w3_ref, b3_ref, o_ref):
    # In-kernel f32 -> bf16 cast of the activation tile (MXU wants bf16 inputs).
    x = x_ref[...].astype(jnp.bfloat16)
    # Layer 1: Linear (bf16 in, f32 acc) + bias + ReLU.
    h1 = jnp.dot(x, w1_ref[...], preferred_element_type=jnp.float32)
    h1 = jnp.maximum(h1 + b1_ref[...], 0.0)
    # Layer 2: Linear + ReLU.
    h2 = jnp.dot(h1.astype(jnp.bfloat16), w2_ref[...],
                 preferred_element_type=jnp.float32)
    h2 = jnp.maximum(h2 + b2_ref[...], 0.0)
    # Layer 3: Linear + Tanh (columns are lane-padded; padded cols are tanh(0)=0).
    h3 = jnp.dot(h2.astype(jnp.bfloat16), w3_ref[...],
                 preferred_element_type=jnp.float32)
    o_ref[...] = jnp.tanh(h3 + b3_ref[...])


def prepare_actor_params(params):
    """One-time weight prep: bf16 casts + lane-padding of the final layer."""
    w1, b1, w2, b2, w3, b3 = params
    action_space = w3.shape[1]
    n_pad = max(128, _round_up(action_space, 128))
    w3p = jnp.zeros((w3.shape[0], n_pad), jnp.float32).at[:, :action_space].set(w3)
    b3p = jnp.zeros((1, n_pad), jnp.float32).at[:, :action_space].set(
        b3.reshape(1, -1))
    return {
        "w1": w1.astype(jnp.bfloat16), "b1": b1.astype(jnp.float32).reshape(1, -1),
        "w2": w2.astype(jnp.bfloat16), "b2": b2.astype(jnp.float32).reshape(1, -1),
        "w3": w3p.astype(jnp.bfloat16), "b3": b3p,
        "action_space": action_space, "n_pad": n_pad,
    }


def actor_forward(x, prepared, observation_space, *, batch_tile=2048):
    """x: any shape reshapeable to (-1, observation_space). Returns (B, action_space) f32."""
    x2d = x.reshape(-1, observation_space).astype(jnp.float32)
    B = x2d.shape[0]
    action_space = prepared["action_space"]
    n_pad = prepared["n_pad"]

    if B == 0:
        return jnp.zeros((0, action_space), jnp.float32)

    TB = _choose_batch_tile(B, batch_tile)
    grid = (pl.cdiv(B, TB),)

    resident = lambda shape: pl.BlockSpec(shape, lambda i: (0, 0))

    out = pl.pallas_call(
        actor_kernel,
        out_shape=jax.ShapeDtypeStruct((B, n_pad), jnp.float32),
        grid=grid,
        in_specs=[
            pl.BlockSpec((TB, observation_space), lambda i: (i, 0)),      # x tile
            resident(prepared["w1"].shape), resident(prepared["b1"].shape),  # layer 1
            resident(prepared["w2"].shape), resident(prepared["b2"].shape),  # layer 2
            resident(prepared["w3"].shape), resident(prepared["b3"].shape),  # layer 3
        ],
        out_specs=pl.BlockSpec((TB, n_pad), lambda i: (i, 0)),
        compiler_params=pltpu.CompilerParams(
            dimension_semantics=("parallel",),
        ),
    )(x2d, prepared["w1"], prepared["b1"], prepared["w2"], prepared["b2"],
      prepared["w3"], prepared["b3"])

    return out[:, :action_space]


def xavier_uniform(key, fan_in, fan_out):
    bound = math.sqrt(6.0 / (fan_in + fan_out))
    return jax.random.uniform(key, (fan_in, fan_out), jnp.float32, -bound, bound)


def linear_bias(key, fan_in, fan_out):
    # PyTorch nn.Linear default bias init: U(-1/sqrt(fan_in), 1/sqrt(fan_in)).
    bound = 1.0 / math.sqrt(fan_in)
    return jax.random.uniform(key, (1, fan_out), jnp.float32, -bound, bound)


def make_actor_params(key, observation_space, action_space):
    h1 = observation_space * 16
    h2 = observation_space * 8
    k = jax.random.split(key, 6)
    w1 = xavier_uniform(k[0], observation_space, h1)
    b1 = linear_bias(k[1], observation_space, h1)
    w2 = xavier_uniform(k[2], h1, h2)
    b2 = linear_bias(k[3], h1, h2)
    w3 = xavier_uniform(k[4], h2, action_space)
    b3 = linear_bias(k[5], h2, action_space)
    return (w1, b1, w2, b2, w3, b3)


def reference_forward(x, params, observation_space):
    # Plain-JAX reference mirroring the kernel math (bf16 matmul inputs, f32 acc).
    w1, b1, w2, b2, w3, b3 = params
    h = x.reshape(-1, observation_space).astype(jnp.float32)
    h = jnp.maximum(
        jnp.dot(h.astype(jnp.bfloat16), w1.astype(jnp.bfloat16),
                preferred_element_type=jnp.float32) + b1, 0.0)
    h = jnp.maximum(
        jnp.dot(h.astype(jnp.bfloat16), w2.astype(jnp.bfloat16),
                preferred_element_type=jnp.float32) + b2, 0.0)
    h = jnp.tanh(
        jnp.dot(h.astype(jnp.bfloat16), w3.astype(jnp.bfloat16),
                preferred_element_type=jnp.float32) + b3)
    return h


if __name__ == "__main__":
    observation_space = 32
    action_space = 8

    key = jax.random.PRNGKey(0)
    pkey, xkey, xkey2 = jax.random.split(key, 3)
    params = make_actor_params(pkey, observation_space, action_space)
    prepared = prepare_actor_params(params)  # one-time weight prep, off the hot path

    # Small batch (single grid step, ragged 4-row block inside a 16-row tile).
    batch = 4
    x = jax.random.normal(xkey, (batch, observation_space), jnp.float32)
    out = jax.block_until_ready(actor_forward(x, prepared, observation_space))
    assert out.shape == (batch, action_space)
    ref = reference_forward(x, params, observation_space)
    assert jnp.allclose(out, ref, atol=2e-2, rtol=2e-2)

    # Larger, non-multiple batch: >=2 grid steps (dual-TC on v7x) + ragged last tile.
    big_batch = 1000
    xb = jax.random.normal(xkey2, (big_batch, observation_space), jnp.float32)
    out_b = jax.block_until_ready(actor_forward(xb, prepared, observation_space))
    assert out_b.shape == (big_batch, action_space)
    ref_b = reference_forward(xb, params, observation_space)
    assert jnp.allclose(out_b, ref_b, atol=2e-2, rtol=2e-2)

    print("KERNEL_OK")
</pallas_src>

<mosaic_0001>
module attributes {stable_mosaic.version = 11 : i64} {
  func.func @actor_kernel(%arg0: i32, %arg1: memref<16x32xf32, #tpu.memory_space<vmem>>, %arg2: memref<32x512xbf16, #tpu.memory_space<vmem>>, %arg3: memref<1x512xf32, #tpu.memory_space<vmem>>, %arg4: memref<512x256xbf16, #tpu.memory_space<vmem>>, %arg5: memref<1x256xf32, #tpu.memory_space<vmem>>, %arg6: memref<256x128xbf16, #tpu.memory_space<vmem>>, %arg7: memref<1x128xf32, #tpu.memory_space<vmem>>, %arg8: memref<16x128xf32, #tpu.memory_space<vmem>>) attributes {dimension_semantics = [#tpu.dimension_semantics<parallel>], iteration_bounds = array<i64: 1>, scalar_prefetch = 0 : i64, scratch_operands = 0 : i64, tpu.core_type = #tpu.core_type<tc>, window_params = [{transform_indices = @transform_0, window_bounds = array<i64: 16, 32>}, {pipeline_mode = #tpu.pipeline_mode<synchronous>, transform_indices = @transform_1, window_bounds = array<i64: 32, 512>}, {pipeline_mode = #tpu.pipeline_mode<synchronous>, transform_indices = @transform_2, window_bounds = array<i64: 1, 512>}, {pipeline_mode = #tpu.pipeline_mode<synchronous>, transform_indices = @transform_3, window_bounds = array<i64: 512, 256>}, {pipeline_mode = #tpu.pipeline_mode<synchronous>, transform_indices = @transform_4, window_bounds = array<i64: 1, 256>}, {pipeline_mode = #tpu.pipeline_mode<synchronous>, transform_indices = @transform_5, window_bounds = array<i64: 256, 128>}, {pipeline_mode = #tpu.pipeline_mode<synchronous>, transform_indices = @transform_6, window_bounds = array<i64: 1, 128>}, {transform_indices = @transform_7, window_bounds = array<i64: 16, 128>}]} {
    %c0 = arith.constant 0 : index
    %c0_0 = arith.constant 0 : index
    %0 = vector.load %arg1[%c0, %c0_0] : memref<16x32xf32, #tpu.memory_space<vmem>>, vector<16x32xf32>
    %1 = arith.truncf %0 : vector<16x32xf32> to vector<16x32xbf16>
    %c0_1 = arith.constant 0 : index
    %c0_2 = arith.constant 0 : index
    %2 = vector.load %arg2[%c0_1, %c0_2] : memref<32x512xbf16, #tpu.memory_space<vmem>>, vector<32x512xbf16>
    %cst = arith.constant dense<0.000000e+00> : vector<16x512xf32>
    %3 = tpu.matmul %1, %2, %cst {dimension_numbers = #tpu.dot_dimension_numbers<[1], [0], [0], [1], [0, 0, 1, 1], [], []>} : vector<16x32xbf16>, vector<32x512xbf16>, vector<16x512xf32> -> vector<16x512xf32>
    %c0_3 = arith.constant 0 : index
    %c0_4 = arith.constant 0 : index
    %4 = vector.load %arg3[%c0_3, %c0_4] : memref<1x512xf32, #tpu.memory_space<vmem>>, vector<1x512xf32>
    %5 = vector.broadcast %4 : vector<1x512xf32> to vector<16x512xf32>
    %6 = arith.addf %3, %5 : vector<16x512xf32>
    %cst_5 = arith.constant 0.000000e+00 : f32
    %7 = vector.broadcast %cst_5 : f32 to vector<16x512xf32>
    %8 = arith.maximumf %6, %7 : vector<16x512xf32>
    %9 = arith.truncf %8 : vector<16x512xf32> to vector<16x512xbf16>
    %c0_6 = arith.constant 0 : index
    %c0_7 = arith.constant 0 : index
    %10 = vector.load %arg4[%c0_6, %c0_7] : memref<512x256xbf16, #tpu.memory_space<vmem>>, vector<512x256xbf16>
    %cst_8 = arith.constant dense<0.000000e+00> : vector<16x256xf32>
    %11 = tpu.matmul %9, %10, %cst_8 {dimension_numbers = #tpu.dot_dimension_numbers<[1], [0], [0], [1], [0, 0, 1, 1], [], []>} : vector<16x512xbf16>, vector<512x256xbf16>, vector<16x256xf32> -> vector<16x256xf32>
    %c0_9 = arith.constant 0 : index
    %c0_10 = arith.constant 0 : index
    %12 = vector.load %arg5[%c0_9, %c0_10] : memref<1x256xf32, #tpu.memory_space<vmem>>, vector<1x256xf32>
    %13 = vector.broadcast %12 : vector<1x256xf32> to vector<16x256xf32>
    %14 = arith.addf %11, %13 : vector<16x256xf32>
    %cst_11 = arith.constant 0.000000e+00 : f32
    %15 = vector.broadcast %cst_11 : f32 to vector<16x256xf32>
    %16 = arith.maximumf %14, %15 : vector<16x256xf32>
    %17 = arith.truncf %16 : vector<16x256xf32> to vector<16x256xbf16>
    %c0_12 = arith.constant 0 : index
    %c0_13 = arith.constant 0 : index
    %18 = vector.load %arg6[%c0_12, %c0_13] : memref<256x128xbf16, #tpu.memory_space<vmem>>, vector<256x128xbf16>
    %cst_14 = arith.constant dense<0.000000e+00> : vector<16x128xf32>
    %19 = tpu.matmul %17, %18, %cst_14 {dimension_numbers = #tpu.dot_dimension_numbers<[1], [0], [0], [1], [0, 0, 1, 1], [], []>} : vector<16x256xbf16>, vector<256x128xbf16>, vector<16x128xf32> -> vector<16x128xf32>
    %c0_15 = arith.constant 0 : index
    %c0_16 = arith.constant 0 : index
    %20 = vector.load %arg7[%c0_15, %c0_16] : memref<1x128xf32, #tpu.memory_space<vmem>>, vector<1x128xf32>
    %21 = vector.broadcast %20 : vector<1x128xf32> to vector<16x128xf32>
    %22 = arith.addf %19, %21 : vector<16x128xf32>
    %23 = math.tanh %22 : vector<16x128xf32>
    %c0_17 = arith.constant 0 : index
    %c0_18 = arith.constant 0 : index
    %24 = vector.load %arg8[%c0_17, %c0_18] : memref<16x128xf32, #tpu.memory_space<vmem>>, vector<16x128xf32>
    tpu.vector_store %arg8[%c0_17, %c0_18], %23 {strides = array<i32>} : memref<16x128xf32, #tpu.memory_space<vmem>>, vector<16x128xf32>,
    return
  }
  func.func @transform_0(%arg0: i32) -> (i32, i32) {
    %c0_i32 = arith.constant 0 : i32
    %c0_i32_0 = arith.constant 0 : i32
    return %arg0, %c0_i32 : i32, i32
  }
  func.func @transform_1(%arg0: i32) -> (i32, i32) {
    %c0_i32 = arith.constant 0 : i32
    %c0_i32_0 = arith.constant 0 : i32
    %c0_i32_1 = arith.constant 0 : i32
    return %c0_i32, %c0_i32_0 : i32, i32
  }
  func.func @transform_2(%arg0: i32) -> (i32, i32) {
    %c0_i32 = arith.constant 0 : i32
    %c0_i32_0 = arith.constant 0 : i32
    %c0_i32_1 = arith.constant 0 : i32
    return %c0_i32, %c0_i32_0 : i32, i32
  }
  func.func @transform_3(%arg0: i32) -> (i32, i32) {
    %c0_i32 = arith.constant 0 : i32
    %c0_i32_0 = arith.constant 0 : i32
    %c0_i32_1 = arith.constant 0 : i32
    return %c0_i32, %c0_i32_0 : i32, i32
  }
  func.func @transform_4(%arg0: i32) -> (i32, i32) {
    %c0_i32 = arith.constant 0 : i32
    %c0_i32_0 = arith.constant 0 : i32
    %c0_i32_1 = arith.constant 0 : i32
    return %c0_i32, %c0_i32_0 : i32, i32
  }
  func.func @transform_5(%arg0: i32) -> (i32, i32) {
    %c0_i32 = arith.constant 0 : i32
    %c0_i32_0 = arith.constant 0 : i32
    %c0_i32_1 = arith.constant 0 : i32
    return %c0_i32, %c0_i32_0 : i32, i32
  }
  func.func @transform_6(%arg0: i32) -> (i32, i32) {
    %c0_i32 = arith.constant 0 : i32
    %c0_i32_0 = arith.constant 0 : i32
    %c0_i32_1 = arith.constant 0 : i32
    return %c0_i32, %c0_i32_0 : i32, i32
  }
  func.func @transform_7(%arg0: i32) -> (i32, i32) {
    %c0_i32 = arith.constant 0 : i32
    %c0_i32_0 = arith.constant 0 : i32
    return %arg0, %c0_i32 : i32, i32
  }
}

</mosaic_0001>

<llo_original>
// kernel: tpu_custom_call.1
$region0: #{tpu_custom_call.1}
  #allocation0 [shape = 'u32[]', space=smem, size = 0x4, offset = 0x4, fixed_abs, tag = 'smem constant byte address 0x4 - core index']
  #allocation1 [shape = 'u32[72,128]{1,0:T(1,128)}', space=vmem, size = 0x9000, scoped, tag = 'internal scratch']
  %s0 = inlined_call_operand.hbm [shape: f32[4,32], index: 0, kind: input, shape index: {}]
  %s1 = inlined_call_operand.hbm [shape: bf16[32,512], index: 1, kind: input, shape index: {}]
  %s2 = inlined_call_operand.hbm [shape: f32[1,512], index: 2, kind: input, shape index: {}]
  %s3 = inlined_call_operand.hbm [shape: bf16[512,256], index: 3, kind: input, shape index: {}]
  %s4 = inlined_call_operand.vmem [shape: f32[1,256], index: 4, kind: input, shape index: {}]
  %s5 = inlined_call_operand.hbm [shape: bf16[256,128], index: 5, kind: input, shape index: {}]
  %s6 = inlined_call_operand.vmem [shape: f32[1,128], index: 6, kind: input, shape index: {}]
  %s7 = inlined_call_operand.hbm [shape: f32[4,128], index: 7, kind: output, shape index: {}]
  %s8 = sld [smem:[#allocation0]]
  $region58: #{tpu_custom_call.1} parent=0
    _
  %s10 = ssub.s32 1, %s8
  %s11 = scalar_select 0, %s10, %s8
  $region1: #{tpu_custom_call.1} parent=0
    #allocation2 [shape = 'u8[8192]{0}', space=vmem, size = 0x2000, scoped, tag = 'input window, operand 0, single buffered']
    #allocation3 [shape = 's32[1]{0}', space=sflag, size = 0x4, scoped, tag = 'scoped memory for tpu_custom_call.1']
    #allocation4 [shape = 's32[1]{0}', space=sflag, size = 0x4, scoped, tag = 'scoped memory for tpu_custom_call.1']
    #allocation5 [shape = 'u8[32768]{0}', space=vmem, size = 0x8000, scoped, tag = 'input window, operand 1, single buffered']
    #allocation6 [shape = 's32[1]{0}', space=sflag, size = 0x4, scoped, tag = 'scoped memory for tpu_custom_call.1']
    #allocation7 [shape = 'u8[2048]{0}', space=vmem, size = 0x800, scoped, tag = 'input window, operand 2, single buffered']
    #allocation8 [shape = 'u8[262144]{0}', space=vmem, size = 0x40000, scoped, tag = 'input window, operand 3, single buffered']
    #allocation9 [shape = 's32[1]{0}', space=sflag, size = 0x4, scoped, tag = 'scoped memory for tpu_custom_call.1']
    #allocation10 [shape = 'u8[65536]{0}', space=vmem, size = 0x10000, scoped, tag = 'input window, operand 5, single buffered']
    #allocation11 [shape = 'u8[8192]{0}', space=vmem, size = 0x2000, scoped, tag = 'output window, operand 0, single buffered']
    %12 = vsyncpa [#allocation3], 0
    %13 = vsyncpa [#allocation6], 0
    %14 = vsyncpa [#allocation9], 0
    %15 = vsyncpa [#allocation4], 0
    // Predicated region
    $region2: #{tpu_custom_call.1} parent=1 // pred_check
      _
    $region3: #{tpu_custom_call.1} parent=1 // pred_check_branch
      %17 = sbr.rel (0) target = $region5
    $region4: #{tpu_custom_call.1} parent=1 // pred_region
      %19 = vsyncadd [#allocation3], 192
      %s20 = sshll.u32 %s0, 4
      %s21 = int_to_ptr.hbm [resolvable:$true] %s20
      %s22 = sshll.u32 [#allocation2], 4
      %s23 = int_to_ptr.vmem [resolvable:$true] %s22
      %28 = dma.hbm_to_vmem [thread:$0]  %s21, 64, %s23, [#allocation3], 64, 64, 4
    $region5: #{tpu_custom_call.1} parent=1 // pred_fallthru
      _
    // Predicated region
    $region6: #{tpu_custom_call.1} parent=1 // pred_check
      _
    $region7: #{tpu_custom_call.1} parent=1 // pred_check_branch
      %30 = sbr.rel (0) target = $region9
    $region8: #{tpu_custom_call.1} parent=1 // pred_region
      %32 = vsyncadd [#allocation6], 0
      %s33 = sshll.u32 %s1, 4
      %s34 = int_to_ptr.hbm [resolvable:$true] %s33
      %s35 = sshll.u32 [#allocation5], 4
      %s36 = int_to_ptr.vmem [resolvable:$true] %s35
      %41 = dma.hbm_to_vmem [thread:$0]  %s34, 1024, %s36, [#allocation6], 256, 256, 16
    $region9: #{tpu_custom_call.1} parent=1 // pred_fallthru
      _
    // Predicated region
    $region10: #{tpu_custom_call.1} parent=1 // pred_check
      _
    $region11: #{tpu_custom_call.1} parent=1 // pred_check_branch
      %43 = sbr.rel (0) target = $region13
    $region12: #{tpu_custom_call.1} parent=1 // pred_region
      %45 = vsyncadd [#allocation6], 0
      %s47 = sshll.u32 %s2, 4
      %s48 = int_to_ptr.hbm [resolvable:$true] %s47
      %s49 = sshll.u32 [#allocation7], 4
      %s50 = int_to_ptr.vmem [resolvable:$true] %s49
      %52 = dma.hbm_to_vmem [thread:$0]  %s48, 64, %s50, [#allocation6]
    $region13: #{tpu_custom_call.1} parent=1 // pred_fallthru
      _
    // Predicated region
    $region14: #{tpu_custom_call.1} parent=1 // pred_check
      _
    $region15: #{tpu_custom_call.1} parent=1 // pred_check_branch
      %54 = sbr.rel (0) target = $region17
    $region16: #{tpu_custom_call.1} parent=1 // pred_region
      %56 = vsyncadd [#allocation9], 0
      %s57 = sshll.u32 %s3, 4
      %s58 = int_to_ptr.hbm [resolvable:$true] %s57
      %s59 = sshll.u32 [#allocation8], 4
      %s60 = int_to_ptr.vmem [resolvable:$true] %s59
      %65 = dma.hbm_to_vmem [thread:$0]  %s58, 8192, %s60, [#allocation9], 128, 128, 8
    $region17: #{tpu_custom_call.1} parent=1 // pred_fallthru
      _
    // Predicated region
    $region18: #{tpu_custom_call.1} parent=1 // pred_check
      _
    $region19: #{tpu_custom_call.1} parent=1 // pred_check_branch
      %67 = sbr.rel (0) target = $region21
    $region20: #{tpu_custom_call.1} parent=1 // pred_region
      _
    $region21: #{tpu_custom_call.1} parent=1 // pred_fallthru
      _
    // Predicated region
    $region22: #{tpu_custom_call.1} parent=1 // pred_check
      _
    $region23: #{tpu_custom_call.1} parent=1 // pred_check_branch
      %69 = sbr.rel (0) target = $region25
    $region24: #{tpu_custom_call.1} parent=1 // pred_region
      %71 = vsyncadd [#allocation9], 0
      %s72 = sshll.u32 %s5, 4
      %s73 = int_to_ptr.hbm [resolvable:$true] %s72
      %s74 = sshll.u32 [#allocation10], 4
      %s75 = int_to_ptr.vmem [resolvable:$true] %s74
      %80 = dma.hbm_to_vmem [thread:$0]  %s73, 2048, %s75, [#allocation9], 64, 64, 4
    $region25: #{tpu_custom_call.1} parent=1 // pred_fallthru
      _
    // Predicated region
    $region26: #{tpu_custom_call.1} parent=1 // pred_check
      _
    $region27: #{tpu_custom_call.1} parent=1 // pred_check_branch
      %82 = sbr.rel (0) target = $region29
    $region28: #{tpu_custom_call.1} parent=1 // pred_region
      _
    $region29: #{tpu_custom_call.1} parent=1 // pred_fallthru
      _
    // Predicated region
    $region30: #{tpu_custom_call.1} parent=1 // pred_check
      _
    $region31: #{tpu_custom_call.1} parent=1 // pred_check_branch
      %84 = sbr.rel (0) target = $region33
    $region32: #{tpu_custom_call.1} parent=1 // pred_region
      %86 = dma.done [#allocation3], 256
    $region33: #{tpu_custom_call.1} parent=1 // pred_fallthru
      _
    // Predicated region
    $region34: #{tpu_custom_call.1} parent=1 // pred_check
      _
    $region35: #{tpu_custom_call.1} parent=1 // pred_check_branch
      %88 = sbr.rel (0) target = $region37
    $region36: #{tpu_custom_call.1} parent=1 // pred_region
      %90 = dma.done [#allocation6], 1024
    $region37: #{tpu_custom_call.1} parent=1 // pred_fallthru
      _
    // Predicated region
    $region38: #{tpu_custom_call.1} parent=1 // pred_check
      _
    $region39: #{tpu_custom_call.1} parent=1 // pred_check_branch
      %92 = sbr.rel (0) target = $region41
    $region40: #{tpu_custom_call.1} parent=1 // pred_region
      %94 = dma.done [#allocation6], 64
    $region41: #{tpu_custom_call.1} parent=1 // pred_fallthru
      _
    // Predicated region
    $region42: #{tpu_custom_call.1} parent=1 // pred_check
      _
    $region43: #{tpu_custom_call.1} parent=1 // pred_check_branch
      %96 = sbr.rel (0) target = $region45
    $region44: #{tpu_custom_call.1} parent=1 // pred_region
      %98 = dma.done [#allocation9], 8192
    $region45: #{tpu_custom_call.1} parent=1 // pred_fallthru
      _
    // Predicated region
    $region46: #{tpu_custom_call.1} parent=1 // pred_check
      _
    $region47: #{tpu_custom_call.1} parent=1 // pred_check_branch
      %100 = sbr.rel (0) target = $region49
    $region48: #{tpu_custom_call.1} parent=1 // pred_region
      %102 = dma.done [#allocation9], 2048
    $region49: #{tpu_custom_call.1} parent=1 // pred_fallthru
      _
    %v104 = vld [vmem:[#allocation2] sm:$0xff]
    %v105 = vld [vmem:[#allocation2 + $0x8] sm:$0xff]
    %v106 = vpack.c.bf16 %v105, %v104
    %v107 = vld [vmem:[#allocation5] sm:$0xff]
    %v108 = vld [vmem:[#allocation5 + $0x8] sm:$0xff]
    %v109 = vld [vmem:[#allocation5 + $0x10] sm:$0xff]
    %v110 = vld [vmem:[#allocation5 + $0x18] sm:$0xff]
    %v111 = vld [vmem:[#allocation5 + $0x20] sm:$0xff]
    %v112 = vld [vmem:[#allocation5 + $0x28] sm:$0xff]
    %v113 = vld [vmem:[#allocation5 + $0x30] sm:$0xff]
    %v114 = vld [vmem:[#allocation5 + $0x38] sm:$0xff]
    %v115 = vld [vmem:[#allocation7] sm:$0xf]
    %v117 = vperm.slane %v115, 0
    %v118 = vperm.slane %v115, 1
    %v119 = vperm.slane %v115, 2
    %v120 = vperm.slane %v115, 3
    %v133 = vunpack.c.l.b16 %v107
    %v134 = vunpack.c.h.b16 %v107
    %v135 = vunpack.c.l.b16 %v108
    %v136 = vunpack.c.h.b16 %v108
    %v137 = vunpack.c.l.b16 %v109
    %v138 = vunpack.c.h.b16 %v109
    %v139 = vunpack.c.l.b16 %v110
    %v140 = vunpack.c.h.b16 %v110
    %v141 = vunpack.c.l.b16 %v111
    %v142 = vunpack.c.h.b16 %v111
    %v143 = vunpack.c.l.b16 %v112
    %v144 = vunpack.c.h.b16 %v112
    %v145 = vunpack.c.l.b16 %v113
    %v146 = vunpack.c.h.b16 %v113
    %v147 = vunpack.c.l.b16 %v114
    %v148 = vunpack.c.h.b16 %v114
    %v149 = vpack.c.b16 %v137, %v133
    %v150 = vpack.c.b16 %v138, %v134
    %v151 = vpack.c.b16 %v139, %v135
    %v152 = vpack.c.b16 %v140, %v136
    %v153 = vpack.c.b16 %v145, %v141
    %v154 = vpack.c.b16 %v146, %v142
    %v155 = vpack.c.b16 %v147, %v143
    %v156 = vpack.c.b16 %v148, %v144
    %vm165 = vcmask 261120
    %v167 = vsel %vm165, %v106, 0
    %169 = vmatpush.bf16.msra.mxu0 0
    %170 = vmatpush.bf16.msra.mxu0 0
    %171 = vmatpush.bf16.msra.mxu0 0
    %172 = vmatpush.bf16.msra.mxu0 0
    %173 = vmatpush.bf16.msra.mxu0 0
    %174 = vmatpush.bf16.msra.mxu0 0
    %175 = vmatpush.bf16.msra.mxu0 %v153
    %176 = vmatpush.bf16.msra.mxu0 %v149
    %177 = vmatmul.bf16.gmra.mxu0 %v167
    %v178 = vpop.f32.mrf.mxu0
    %v179 = vadd.f32 %v117, %v178
    %v180 = vpop.f32.mrf.mxu0
    %v181 = vadd.f32 %v117, %v180
    %182 = vdwg.mxu0
    %183 = vmatpush.bf16.msra.mxu0 0
    %184 = vmatpush.bf16.msra.mxu0 0
    %185 = vmatpush.bf16.msra.mxu0 0
    %186 = vmatpush.bf16.msra.mxu0 0
    %187 = vmatpush.bf16.msra.mxu0 0
    %188 = vmatpush.bf16.msra.mxu0 0
    %189 = vmatpush.bf16.msra.mxu0 %v154
    %190 = vmatpush.bf16.msra.mxu0 %v150
    %191 = vmatmul.bf16.gmra.mxu0 %v167
    %v192 = vpop.f32.mrf.mxu0
    %v193 = vadd.f32 %v118, %v192
    %v194 = vpop.f32.mrf.mxu0
    %v195 = vadd.f32 %v118, %v194
    %196 = vdwg.mxu0
    %197 = vmatpush.bf16.msra.mxu0 0
    %198 = vmatpush.bf16.msra.mxu0 0
    %199 = vmatpush.bf16.msra.mxu0 0
    %200 = vmatpush.bf16.msra.mxu0 0
    %201 = vmatpush.bf16.msra.mxu0 0
    %202 = vmatpush.bf16.msra.mxu0 0
    %203 = vmatpush.bf16.msra.mxu0 %v155
    %204 = vmatpush.bf16.msra.mxu0 %v151
    %205 = vmatmul.bf16.gmra.mxu0 %v167
    %v206 = vpop.f32.mrf.mxu0
    %v207 = vadd.f32 %v119, %v206
    %v208 = vpop.f32.mrf.mxu0
    %v209 = vadd.f32 %v119, %v208
    %210 = vdwg.mxu0
    %211 = vmatpush.bf16.msra.mxu0 0
    %212 = vmatpush.bf16.msra.mxu0 0
    %213 = vmatpush.bf16.msra.mxu0 0
    %214 = vmatpush.bf16.msra.mxu0 0
    %215 = vmatpush.bf16.msra.mxu0 0
    %216 = vmatpush.bf16.msra.mxu0 0
    %217 = vmatpush.bf16.msra.mxu0 %v156
    %218 = vmatpush.bf16.msra.mxu0 %v152
    %219 = vmatmul.bf16.gmra.mxu0 %v167
    %v220 = vpop.f32.mrf.mxu0
    %v221 = vadd.f32 %v120, %v220
    %v222 = vpop.f32.mrf.mxu0
    %v223 = vadd.f32 %v120, %v222
    %224 = vdwg.mxu0
    %v225 = vmax.f32 %v179, 0.0
    %v226 = vmax.f32 %v193, 0.0
    %v227 = vmax.f32 %v207, 0.0
    %v228 = vmax.f32 %v221, 0.0
    %v229 = vmax.f32 %v181, 0.0
    %v230 = vmax.f32 %v195, 0.0
    %v231 = vmax.f32 %v209, 0.0
    %v232 = vmax.f32 %v223, 0.0
    %v233 = vpack.c.bf16 %v229, %v225
    %v234 = vpack.c.bf16 %v230, %v226
    %v235 = vpack.c.bf16 %v231, %v227
    %v236 = vpack.c.bf16 %v232, %v228
    %v237 = vld [vmem:[#allocation8] sm:$0xff]
    %v238 = vld [vmem:[#allocation8 + $0x8] sm:$0xff]
    %v239 = vld [vmem:[#allocation8 + $0x10] sm:$0xff]
    %v240 = vld [vmem:[#allocation8 + $0x18] sm:$0xff]
    %v241 = vld [vmem:[#allocation8 + $0x20] sm:$0xff]
    %v242 = vld [vmem:[#allocation8 + $0x28] sm:$0xff]
    %v243 = vld [vmem:[#allocation8 + $0x30] sm:$0xff]
    %v244 = vld [vmem:[#allocation8 + $0x38] sm:$0xff]
    %v245 = vld [vmem:[#allocation8 + $0x40] sm:$0xff]
    %v246 = vld [vmem:[#allocation8 + $0x48] sm:$0xff]
    %v247 = vld [vmem:[#allocation8 + $0x50] sm:$0xff]
    %v248 = vld [vmem:[#allocation8 + $0x58] sm:$0xff]
    %v249 = vld [vmem:[#allocation8 + $0x60] sm:$0xff]
    %v250 = vld [vmem:[#allocation8 + $0x68] sm:$0xff]
    %v251 = vld [vmem:[#allocation8 + $0x70] sm:$0xff]
    %v252 = vld [vmem:[#allocation8 + $0x78] sm:$0xff]
    %v253 = vld [vmem:[#allocation8 + $0x80] sm:$0xff]
    %v254 = vld [vmem:[#allocation8 + $0x88] sm:$0xff]
    %v255 = vld [vmem:[#allocation8 + $0x90] sm:$0xff]
    %v256 = vld [vmem:[#allocation8 + $0x98] sm:$0xff]
    %v257 = vld [vmem:[#allocation8 + $0xa0] sm:$0xff]
    %v258 = vld [vmem:[#allocation8 + $0xa8] sm:$0xff]
    %v259 = vld [vmem:[#allocation8 + $0xb0] sm:$0xff]
    %v260 = vld [vmem:[#allocation8 + $0xb8] sm:$0xff]
    %v261 = vld [vmem:[#allocation8 + $0xc0] sm:$0xff]
    %v262 = vld [vmem:[#allocation8 + $0xc8] sm:$0xff]
    %v263 = vld [vmem:[#allocation8 + $0xd0] sm:$0xff]
    %v264 = vld [vmem:[#allocation8 + $0xd8] sm:$0xff]
    %v265 = vld [vmem:[#allocation8 + $0xe0] sm:$0xff]
    %v266 = vld [vmem:[#allocation8 + $0xe8] sm:$0xff]
    %v267 = vld [vmem:[#allocation8 + $0xf0] sm:$0xff]
    %v268 = vld [vmem:[#allocation8 + $0xf8] sm:$0xff]
    %v269 = vld [vmem:[#allocation8 + $0x100] sm:$0xff]
    %v270 = vld [vmem:[#allocation8 + $0x108] sm:$0xff]
    %v271 = vld [vmem:[#allocation8 + $0x110] sm:$0xff]
    %v272 = vld [vmem:[#allocation8 + $0x118] sm:$0xff]
    %v273 = vld [vmem:[#allocation8 + $0x120] sm:$0xff]
    %v274 = vld [vmem:[#allocation8 + $0x128] sm:$0xff]
    %v275 = vld [vmem:[#allocation8 + $0x130] sm:$0xff]
    %v276 = vld [vmem:[#allocation8 + $0x138] sm:$0xff]
    %v277 = vld [vmem:[#allocation8 + $0x140] sm:$0xff]
    %v278 = vld [vmem:[#allocation8 + $0x148] sm:$0xff]
    %v279 = vld [vmem:[#allocation8 + $0x150] sm:$0xff]
    %v280 = vld [vmem:[#allocation8 + $0x158] sm:$0xff]
    %v281 = vld [vmem:[#allocation8 + $0x160] sm:$0xff]
    %v282 = vld [vmem:[#allocation8 + $0x168] sm:$0xff]
    %v283 = vld [vmem:[#allocation8 + $0x170] sm:$0xff]
    %v284 = vld [vmem:[#allocation8 + $0x178] sm:$0xff]
    %v285 = vld [vmem:[#allocation8 + $0x180] sm:$0xff]
    %v286 = vld [vmem:[#allocation8 + $0x188] sm:$0xff]
    %v287 = vld [vmem:[#allocation8 + $0x190] sm:$0xff]
    %v288 = vld [vmem:[#allocation8 + $0x198] sm:$0xff]
    %v289 = vld [vmem:[#allocation8 + $0x1a0] sm:$0xff]
    %v290 = vld [vmem:[#allocation8 + $0x1a8] sm:$0xff]
    %v291 = vld [vmem:[#allocation8 + $0x1b0] sm:$0xff]
    %v292 = vld [vmem:[#allocation8 + $0x1b8] sm:$0xff]
    %v293 = vld [vmem:[#allocation8 + $0x1c0] sm:$0xff]
    %v294 = vld [vmem:[#allocation8 + $0x1c8] sm:$0xff]
    %v295 = vld [vmem:[#allocation8 + $0x1d0] sm:$0xff]
    %v296 = vld [vmem:[#allocation8 + $0x1d8] sm:$0xff]
    %v297 = vld [vmem:[#allocation8 + $0x1e0] sm:$0xff]
    %v298 = vld [vmem:[#allocation8 + $0x1e8] sm:$0xff]
    %v299 = vld [vmem:[#allocation8 + $0x1f0] sm:$0xff]
    %v300 = vld [vmem:[#allocation8 + $0x1f8] sm:$0xff]
    %v301 = vld [vmem:[%s4] sm:$0x3]
    %v303 = vperm.slane %v301, 0
    %v304 = vperm.slane %v301, 1
    %v371 = vunpack.c.l.b16 %v237
    %v372 = vunpack.c.h.b16 %v237
    %v373 = vunpack.c.l.b16 %v238
    %v374 = vunpack.c.h.b16 %v238
    %v375 = vunpack.c.l.b16 %v239
    %v376 = vunpack.c.h.b16 %v239
    %v377 = vunpack.c.l.b16 %v240
    %v378 = vunpack.c.h.b16 %v240
    %v379 = vunpack.c.l.b16 %v241
    %v380 = vunpack.c.h.b16 %v241
    %v381 = vunpack.c.l.b16 %v242
    %v382 = vunpack.c.h.b16 %v242
    %v383 = vunpack.c.l.b16 %v243
    %v384 = vunpack.c.h.b16 %v243
    %v385 = vunpack.c.l.b16 %v244
    %v386 = vunpack.c.h.b16 %v244
    %v387 = vunpack.c.l.b16 %v245
    %v388 = vunpack.c.h.b16 %v245
    %v389 = vunpack.c.l.b16 %v246
    %v390 = vunpack.c.h.b16 %v246
    %v391 = vunpack.c.l.b16 %v247
    %v392 = vunpack.c.h.b16 %v247
    %v393 = vunpack.c.l.b16 %v248
    %v394 = vunpack.c.h.b16 %v248
    %v395 = vunpack.c.l.b16 %v249
    %v396 = vunpack.c.h.b16 %v249
    %v397 = vunpack.c.l.b16 %v250
    %v398 = vunpack.c.h.b16 %v250
    %v399 = vunpack.c.l.b16 %v251
    %v400 = vunpack.c.h.b16 %v251
    %v401 = vunpack.c.l.b16 %v252
    %v402 = vunpack.c.h.b16 %v252
    %v403 = vunpack.c.l.b16 %v253
    %v404 = vunpack.c.h.b16 %v253
    %v405 = vunpack.c.l.b16 %v254
    %v406 = vunpack.c.h.b16 %v254
    %v407 = vunpack.c.l.b16 %v255
    %v408 = vunpack.c.h.b16 %v255
    %v409 = vunpack.c.l.b16 %v256
    %v410 = vunpack.c.h.b16 %v256
    %v411 = vunpack.c.l.b16 %v257
    %v412 = vunpack.c.h.b16 %v257
    %v413 = vunpack.c.l.b16 %v258
    %v414 = vunpack.c.h.b16 %v258
    %v415 = vunpack.c.l.b16 %v259
    %v416 = vunpack.c.h.b16 %v259
    %v417 = vunpack.c.l.b16 %v260
    %v418 = vunpack.c.h.b16 %v260
    %v419 = vunpack.c.l.b16 %v261
    %v420 = vunpack.c.h.b16 %v261
    %v421 = vunpack.c.l.b16 %v262
    %v422 = vunpack.c.h.b16 %v262
    %v423 = vunpack.c.l.b16 %v263
    %v424 = vunpack.c.h.b16 %v263
    %v425 = vunpack.c.l.b16 %v264
    %v426 = vunpack.c.h.b16 %v264
    %v427 = vunpack.c.l.b16 %v265
    %v428 = vunpack.c.h.b16 %v265
    %v429 = vunpack.c.l.b16 %v266
    %v430 = vunpack.c.h.b16 %v266
    %v431 = vunpack.c.l.b16 %v267
    %v432 = vunpack.c.h.b16 %v267
    %v433 = vunpack.c.l.b16 %v268
    %v434 = vunpack.c.h.b16 %v268
    %v435 = vunpack.c.l.b16 %v269
    %v436 = vunpack.c.h.b16 %v269
    %v437 = vunpack.c.l.b16 %v270
    %v438 = vunpack.c.h.b16 %v270
    %v439 = vunpack.c.l.b16 %v271
    %v440 = vunpack.c.h.b16 %v271
    %v441 = vunpack.c.l.b16 %v272
    %v442 = vunpack.c.h.b16 %v272
    %v443 = vunpack.c.l.b16 %v273
    %v444 = vunpack.c.h.b16 %v273
    %v445 = vunpack.c.l.b16 %v274
    %v446 = vunpack.c.h.b16 %v274
    %v447 = vunpack.c.l.b16 %v275
    %v448 = vunpack.c.h.b16 %v275
    %v449 = vunpack.c.l.b16 %v276
    %v450 = vunpack.c.h.b16 %v276
    %v451 = vunpack.c.l.b16 %v277
    %v452 = vunpack.c.h.b16 %v277
    %v453 = vunpack.c.l.b16 %v278
    %v454 = vunpack.c.h.b16 %v278
    %v455 = vunpack.c.l.b16 %v279
    %v456 = vunpack.c.h.b16 %v279
    %v457 = vunpack.c.l.b16 %v280
    %v458 = vunpack.c.h.b16 %v280
    %v459 = vunpack.c.l.b16 %v281
    %v460 = vunpack.c.h.b16 %v281
    %v461 = vunpack.c.l.b16 %v282
    %v462 = vunpack.c.h.b16 %v282
    %v463 = vunpack.c.l.b16 %v283
    %v464 = vunpack.c.h.b16 %v283
    %v465 = vunpack.c.l.b16 %v284
    %v466 = vunpack.c.h.b16 %v284
    %v467 = vunpack.c.l.b16 %v285
    %v468 = vunpack.c.h.b16 %v285
    %v469 = vunpack.c.l.b16 %v286
    %v470 = vunpack.c.h.b16 %v286
    %v471 = vunpack.c.l.b16 %v287
    %v472 = vunpack.c.h.b16 %v287
    %v473 = vunpack.c.l.b16 %v288
    %v474 = vunpack.c.h.b16 %v288
    %v475 = vunpack.c.l.b16 %v289
    %v476 = vunpack.c.h.b16 %v289
    %v477 = vunpack.c.l.b16 %v290
    %v478 = vunpack.c.h.b16 %v290
    %v479 = vunpack.c.l.b16 %v291
    %v480 = vunpack.c.h.b16 %v291
    %v481 = vunpack.c.l.b16 %v292
    %v482 = vunpack.c.h.b16 %v292
    %v483 = vunpack.c.l.b16 %v293
    %v484 = vunpack.c.h.b16 %v293
    %v485 = vunpack.c.l.b16 %v294
    %v486 = vunpack.c.h.b16 %v294
    %v487 = vunpack.c.l.b16 %v295
    %v488 = vunpack.c.h.b16 %v295
    %v489 = vunpack.c.l.b16 %v296
    %v490 = vunpack.c.h.b16 %v296
    %v491 = vunpack.c.l.b16 %v297
    %v492 = vunpack.c.h.b16 %v297
    %v493 = vunpack.c.l.b16 %v298
    %v494 = vunpack.c.h.b16 %v298
    %v495 = vunpack.c.l.b16 %v299
    %v496 = vunpack.c.h.b16 %v299
    %v497 = vunpack.c.l.b16 %v300
    %v498 = vunpack.c.h.b16 %v300
    %v499 = vpack.c.b16 %v373, %v371
    %v500 = vpack.c.b16 %v374, %v372
    %v501 = vpack.c.b16 %v377, %v375
    %v502 = vpack.c.b16 %v378, %v376
    %v503 = vpack.c.b16 %v381, %v379
    %v504 = vpack.c.b16 %v382, %v380
    %v505 = vpack.c.b16 %v385, %v383
    %v506 = vpack.c.b16 %v386, %v384
    %v507 = vpack.c.b16 %v389, %v387
    %v508 = vpack.c.b16 %v390, %v388
    %v509 = vpack.c.b16 %v393, %v391
    %v510 = vpack.c.b16 %v394, %v392
    %v511 = vpack.c.b16 %v397, %v395
    %v512 = vpack.c.b16 %v398, %v396
    %v513 = vpack.c.b16 %v401, %v399
    %v514 = vpack.c.b16 %v402, %v400
    %v515 = vpack.c.b16 %v405, %v403
    %v516 = vpack.c.b16 %v406, %v404
    %v517 = vpack.c.b16 %v409, %v407
    %v518 = vpack.c.b16 %v410, %v408
    %v519 = vpack.c.b16 %v413, %v411
    %v520 = vpack.c.b16 %v414, %v412
    %v521 = vpack.c.b16 %v417, %v415
    %v522 = vpack.c.b16 %v418, %v416
    %v523 = vpack.c.b16 %v421, %v419
    %v524 = vpack.c.b16 %v422, %v420
    %v525 = vpack.c.b16 %v425, %v423
    %v526 = vpack.c.b16 %v426, %v424
    %v527 = vpack.c.b16 %v429, %v427
    %v528 = vpack.c.b16 %v430, %v428
    %v529 = vpack.c.b16 %v433, %v431
    %v530 = vpack.c.b16 %v434, %v432
    %v531 = vpack.c.b16 %v437, %v435
    %v532 = vpack.c.b16 %v438, %v436
    %v533 = vpack.c.b16 %v441, %v439
    %v534 = vpack.c.b16 %v442, %v440
    %v535 = vpack.c.b16 %v445, %v443
    %v536 = vpack.c.b16 %v446, %v444
    %v537 = vpack.c.b16 %v449, %v447
    %v538 = vpack.c.b16 %v450, %v448
    %v539 = vpack.c.b16 %v453, %v451
    %v540 = vpack.c.b16 %v454, %v452
    %v541 = vpack.c.b16 %v457, %v455
    %v542 = vpack.c.b16 %v458, %v456
    %v543 = vpack.c.b16 %v461, %v459
    %v544 = vpack.c.b16 %v462, %v460
    %v545 = vpack.c.b16 %v465, %v463
    %v546 = vpack.c.b16 %v466, %v464
    %v547 = vpack.c.b16 %v469, %v467
    %v548 = vpack.c.b16 %v470, %v468
    %v549 = vpack.c.b16 %v473, %v471
    %v550 = vpack.c.b16 %v474, %v472
    %v551 = vpack.c.b16 %v477, %v475
    %v552 = vpack.c.b16 %v478, %v476
    %v553 = vpack.c.b16 %v481, %v479
    %v554 = vpack.c.b16 %v482, %v480
    %v555 = vpack.c.b16 %v485, %v483
    %v556 = vpack.c.b16 %v486, %v484
    %v557 = vpack.c.b16 %v489, %v487
    %v558 = vpack.c.b16 %v490, %v488
    %v559 = vpack.c.b16 %v493, %v491
    %v560 = vpack.c.b16 %v494, %v492
    %v561 = vpack.c.b16 %v497, %v495
    %v562 = vpack.c.b16 %v498, %v496
    %627 = vmatpush.bf16.msra.mxu0 %v513
    %628 = vmatpush.bf16.msra.mxu0 %v511
    %629 = vmatpush.bf16.msra.mxu0 %v509
    %630 = vmatpush.bf16.msra.mxu0 %v507
    %631 = vmatpush.bf16.msra.mxu0 %v505
    %632 = vmatpush.bf16.msra.mxu0 %v503
    %633 = vmatpush.bf16.msra.mxu0 %v501
    %634 = vmatpush.bf16.msra.mxu0 %v499
    %635 = vmatmul.bf16.gmra.mxu0 %v233
    %v636 = vpop.f32.mrf.mxu0
    %v637 = vadd.f32 %v303, %v636
    %v638 = vpop.f32.mrf.mxu0
    %v639 = vadd.f32 %v303, %v638
    %640 = vdwg.mxu0
    %641 = vmatpush.bf16.msra.mxu0 %v529
    %642 = vmatpush.bf16.msra.mxu0 %v527
    %643 = vmatpush.bf16.msra.mxu0 %v525
    %644 = vmatpush.bf16.msra.mxu0 %v523
    %645 = vmatpush.bf16.msra.mxu0 %v521
    %646 = vmatpush.bf16.msra.mxu0 %v519
    %647 = vmatpush.bf16.msra.mxu0 %v517
    %648 = vmatpush.bf16.msra.mxu0 %v515
    %649 = vmatmul.bf16.gmra.mxu0 %v234
    %v650 = vpop.f32.mrf.mxu0
    %v651 = vadd.f32 %v637, %v650
    %v652 = vpop.f32.mrf.mxu0
    %v653 = vadd.f32 %v639, %v652
    %654 = vdwg.mxu0
    %655 = vmatpush.bf16.msra.mxu0 %v545
    %656 = vmatpush.bf16.msra.mxu0 %v543
    %657 = vmatpush.bf16.msra.mxu0 %v541
    %658 = vmatpush.bf16.msra.mxu0 %v539
    %659 = vmatpush.bf16.msra.mxu0 %v537
    %660 = vmatpush.bf16.msra.mxu0 %v535
    %661 = vmatpush.bf16.msra.mxu0 %v533
    %662 = vmatpush.bf16.msra.mxu0 %v531
    %663 = vmatmul.bf16.gmra.mxu0 %v235
    %v664 = vpop.f32.mrf.mxu0
    %v665 = vadd.f32 %v651, %v664
    %v666 = vpop.f32.mrf.mxu0
    %v667 = vadd.f32 %v653, %v666
    %668 = vdwg.mxu0
    %669 = vmatpush.bf16.msra.mxu0 %v561
    %670 = vmatpush.bf16.msra.mxu0 %v559
    %671 = vmatpush.bf16.msra.mxu0 %v557
    %672 = vmatpush.bf16.msra.mxu0 %v555
    %673 = vmatpush.bf16.msra.mxu0 %v553
    %674 = vmatpush.bf16.msra.mxu0 %v551
    %675 = vmatpush.bf16.msra.mxu0 %v549
    %676 = vmatpush.bf16.msra.mxu0 %v547
    %677 = vmatmul.bf16.gmra.mxu0 %v236
    %v678 = vpop.f32.mrf.mxu0
    %v679 = vadd.f32 %v665, %v678
    %v680 = vpop.f32.mrf.mxu0
    %v681 = vadd.f32 %v667, %v680
    %682 = vdwg.mxu0
    %683 = vmatpush.bf16.msra.mxu0 %v514
    %684 = vmatpush.bf16.msra.mxu0 %v512
    %685 = vmatpush.bf16.msra.mxu0 %v510
    %686 = vmatpush.bf16.msra.mxu0 %v508
    %687 = vmatpush.bf16.msra.mxu0 %v506
    %688 = vmatpush.bf16.msra.mxu0 %v504
    %689 = vmatpush.bf16.msra.mxu0 %v502
    %690 = vmatpush.bf16.msra.mxu0 %v500
    %691 = vmatmul.bf16.gmra.mxu0 %v233
    %v692 = vpop.f32.mrf.mxu0
    %v693 = vadd.f32 %v304, %v692
    %v694 = vpop.f32.mrf.mxu0
    %v695 = vadd.f32 %v304, %v694
    %696 = vdwg.mxu0
    %697 = vmatpush.bf16.msra.mxu0 %v530
    %698 = vmatpush.bf16.msra.mxu0 %v528
    %699 = vmatpush.bf16.msra.mxu0 %v526
    %700 = vmatpush.bf16.msra.mxu0 %v524
    %701 = vmatpush.bf16.msra.mxu0 %v522
    %702 = vmatpush.bf16.msra.mxu0 %v520
    %703 = vmatpush.bf16.msra.mxu0 %v518
    %704 = vmatpush.bf16.msra.mxu0 %v516
    %705 = vmatmul.bf16.gmra.mxu0 %v234
    %v706 = vpop.f32.mrf.mxu0
    %v707 = vadd.f32 %v693, %v706
    %v708 = vpop.f32.mrf.mxu0
    %v709 = vadd.f32 %v695, %v708
    %710 = vdwg.mxu0
    %711 = vmatpush.bf16.msra.mxu0 %v546
    %712 = vmatpush.bf16.msra.mxu0 %v544
    %713 = vmatpush.bf16.msra.mxu0 %v542
    %714 = vmatpush.bf16.msra.mxu0 %v540
    %715 = vmatpush.bf16.msra.mxu0 %v538
    %716 = vmatpush.bf16.msra.mxu0 %v536
    %717 = vmatpush.bf16.msra.mxu0 %v534
    %718 = vmatpush.bf16.msra.mxu0 %v532
    %719 = vmatmul.bf16.gmra.mxu0 %v235
    %v720 = vpop.f32.mrf.mxu0
    %v721 = vadd.f32 %v707, %v720
    %v722 = vpop.f32.mrf.mxu0
    %v723 = vadd.f32 %v709, %v722
    %724 = vdwg.mxu0
    %725 = vmatpush.bf16.msra.mxu0 %v562
    %726 = vmatpush.bf16.msra.mxu0 %v560
    %727 = vmatpush.bf16.msra.mxu0 %v558
    %728 = vmatpush.bf16.msra.mxu0 %v556
    %729 = vmatpush.bf16.msra.mxu0 %v554
    %730 = vmatpush.bf16.msra.mxu0 %v552
    %731 = vmatpush.bf16.msra.mxu0 %v550
    %732 = vmatpush.bf16.msra.mxu0 %v548
    %733 = vmatmul.bf16.gmra.mxu0 %v236
    %v734 = vpop.f32.mrf.mxu0
    %v735 = vadd.f32 %v721, %v734
    %v736 = vpop.f32.mrf.mxu0
    %v737 = vadd.f32 %v723, %v736
    %738 = vdwg.mxu0
    %v739 = vmax.f32 %v679, 0.0
    %v740 = vmax.f32 %v735, 0.0
    %v741 = vmax.f32 %v681, 0.0
    %v742 = vmax.f32 %v737, 0.0
    %v743 = vpack.c.bf16 %v741, %v739
    %v744 = vpack.c.bf16 %v742, %v740
    %v745 = vld [vmem:[#allocation10] sm:$0xf]
    %v746 = vld [vmem:[#allocation10 + $0x4] sm:$0xf]
    %v747 = vld [vmem:[#allocation10 + $0x8] sm:$0xf]
    %v748 = vld [vmem:[#allocation10 + $0xc] sm:$0xf]
    %v749 = vld [vmem:[#allocation10 + $0x10] sm:$0xf]
    %v750 = vld [vmem:[#allocation10 + $0x14] sm:$0xf]
    %v751 = vld [vmem:[#allocation10 + $0x18] sm:$0xf]
    %v752 = vld [vmem:[#allocation10 + $0x1c] sm:$0xf]
    %v753 = vld [vmem:[#allocation10 + $0x20] sm:$0xf]
    %v754 = vld [vmem:[#allocation10 + $0x24] sm:$0xf]
    %v755 = vld [vmem:[#allocation10 + $0x28] sm:$0xf]
    %v756 = vld [vmem:[#allocation10 + $0x2c] sm:$0xf]
    %v757 = vld [vmem:[#allocation10 + $0x30] sm:$0xf]
    %v758 = vld [vmem:[#allocation10 + $0x34] sm:$0xf]
    %v759 = vld [vmem:[#allocation10 + $0x38] sm:$0xf]
    %v760 = vld [vmem:[#allocation10 + $0x3c] sm:$0xf]
    %v761 = vld [vmem:[#allocation10 + $0x40] sm:$0xf]
    %v762 = vld [vmem:[#allocation10 + $0x44] sm:$0xf]
    %v763 = vld [vmem:[#allocation10 + $0x48] sm:$0xf]
    %v764 = vld [vmem:[#allocation10 + $0x4c] sm:$0xf]
    %v765 = vld [vmem:[#allocation10 + $0x50] sm:$0xf]
    %v766 = vld [vmem:[#allocation10 + $0x54] sm:$0xf]
    %v767 = vld [vmem:[#allocation10 + $0x58] sm:$0xf]
    %v768 = vld [vmem:[#allocation10 + $0x5c] sm:$0xf]
    %v769 = vld [vmem:[#allocation10 + $0x60] sm:$0xf]
    %v770 = vld [vmem:[#allocation10 + $0x64] sm:$0xf]
    %v771 = vld [vmem:[#allocation10 + $0x68] sm:$0xf]
    %v772 = vld [vmem:[#allocation10 + $0x6c] sm:$0xf]
    %v773 = vld [vmem:[#allocation10 + $0x70] sm:$0xf]
    %v774 = vld [vmem:[#allocation10 + $0x74] sm:$0xf]
    %v775 = vld [vmem:[#allocation10 + $0x78] sm:$0xf]
    %v776 = vld [vmem:[#allocation10 + $0x7c] sm:$0xf]
    %v777 = vld [vmem:[%s6] sm:$0x1]
    %v779 = vperm.slane %v777, 0
    %v813 = vunpack.c.l.b16 %v745
    %v814 = vunpack.c.l.b16 %v746
    %v815 = vunpack.c.l.b16 %v747
    %v816 = vunpack.c.l.b16 %v748
    %v817 = vunpack.c.l.b16 %v749
    %v818 = vunpack.c.l.b16 %v750
    %v819 = vunpack.c.l.b16 %v751
    %v820 = vunpack.c.l.b16 %v752
    %v821 = vunpack.c.l.b16 %v753
    %v822 = vunpack.c.l.b16 %v754
    %v823 = vunpack.c.l.b16 %v755
    %v824 = vunpack.c.l.b16 %v756
    %v825 = vunpack.c.l.b16 %v757
    %v826 = vunpack.c.l.b16 %v758
    %v827 = vunpack.c.l.b16 %v759
    %v828 = vunpack.c.l.b16 %v760
    %v829 = vunpack.c.l.b16 %v761
    %v830 = vunpack.c.l.b16 %v762
    %v831 = vunpack.c.l.b16 %v763
    %v832 = vunpack.c.l.b16 %v764
    %v833 = vunpack.c.l.b16 %v765
    %v834 = vunpack.c.l.b16 %v766
    %v835 = vunpack.c.l.b16 %v767
    %v836 = vunpack.c.l.b16 %v768
    %v837 = vunpack.c.l.b16 %v769
    %v838 = vunpack.c.l.b16 %v770
    %v839 = vunpack.c.l.b16 %v771
    %v840 = vunpack.c.l.b16 %v772
    %v841 = vunpack.c.l.b16 %v773
    %v842 = vunpack.c.l.b16 %v774
    %v843 = vunpack.c.l.b16 %v775
    %v844 = vunpack.c.l.b16 %v776
    %v845 = vpack.c.b16 %v814, %v813
    %v846 = vpack.c.b16 %v816, %v815
    %v847 = vpack.c.b16 %v818, %v817
    %v848 = vpack.c.b16 %v820, %v819
    %v849 = vpack.c.b16 %v822, %v821
    %v850 = vpack.c.b16 %v824, %v823
    %v851 = vpack.c.b16 %v826, %v825
    %v852 = vpack.c.b16 %v828, %v827
    %v853 = vpack.c.b16 %v830, %v829
    %v854 = vpack.c.b16 %v832, %v831
    %v855 = vpack.c.b16 %v834, %v833
    %v856 = vpack.c.b16 %v836, %v835
    %v857 = vpack.c.b16 %v838, %v837
    %v858 = vpack.c.b16 %v840, %v839
    %v859 = vpack.c.b16 %v842, %v841
    %v860 = vpack.c.b16 %v844, %v843
    %877 = vmatpush.bf16.msra.mxu0 %v852
    %878 = vmatpush.bf16.msra.mxu0 %v851
    %879 = vmatpush.bf16.msra.mxu0 %v850
    %880 = vmatpush.bf16.msra.mxu0 %v849
    %881 = vmatpush.bf16.msra.mxu0 %v848
    %882 = vmatpush.bf16.msra.mxu0 %v847
    %883 = vmatpush.bf16.msra.mxu0 %v846
    %884 = vmatpush.bf16.msra.mxu0 %v845
    %885 = vmatmul.bf16.gmra.mxu0 %v743
    %v886 = vpop.f32.mrf.mxu0
    %v887 = vadd.f32 %v779, %v886
    %v888 = vpop.f32.mrf.mxu0
    %v889 = vadd.f32 %v779, %v888
    %890 = vdwg.mxu0
    %891 = vmatpush.bf16.msra.mxu0 %v860
    %892 = vmatpush.bf16.msra.mxu0 %v859
    %893 = vmatpush.bf16.msra.mxu0 %v858
    %894 = vmatpush.bf16.msra.mxu0 %v857
    %895 = vmatpush.bf16.msra.mxu0 %v856
    %896 = vmatpush.bf16.msra.mxu0 %v855
    %897 = vmatpush.bf16.msra.mxu0 %v854
    %898 = vmatpush.bf16.msra.mxu0 %v853
    %899 = vmatmul.bf16.gmra.mxu0 %v744
    %v900 = vpop.f32.mrf.mxu0
    %v901 = vadd.f32 %v887, %v900
    %v902 = vpop.f32.mrf.mxu0
    %v903 = vadd.f32 %v889, %v902
    %904 = vdwg.mxu0
    %v905 = vtanh.pop %v901
    %v906 = vtanh.pop %v903
    %907 = vst [vmem:[#allocation11] sm:$0xff] %v905
    %908 = vst [vmem:[#allocation11 + $0x8] sm:$0xff] %v906
    // Predicated region
    $region50: #{tpu_custom_call.1} parent=1 // pred_check
      _
    $region51: #{tpu_custom_call.1} parent=1 // pred_check_branch
      %910 = sbr.rel (0) target = $region53
    $region52: #{tpu_custom_call.1} parent=1 // pred_region
      %912 = vsyncadd [#allocation4], 192
      %s913 = sshll.u32 [#allocation11], 4
      %s914 = int_to_ptr.vmem [resolvable:$true] %s913
      %s915 = sshll.u32 %s7, 4
      %s916 = int_to_ptr.hbm [resolvable:$true] %s915
      %921 = dma.vmem_to_hbm [thread:$0]  %s914, 64, %s916, [#allocation4], 64, 64, 4
    $region53: #{tpu_custom_call.1} parent=1 // pred_fallthru
      _
    // Predicated region
    $region54: #{tpu_custom_call.1} parent=1 // pred_check
      _
    $region55: #{tpu_custom_call.1} parent=1 // pred_check_branch
      %923 = sbr.rel (0) target = $region57
    $region56: #{tpu_custom_call.1} parent=1 // pred_region
      %925 = dma.done [#allocation4], 256
    $region57: #{tpu_custom_call.1} parent=1 // pred_fallthru
      _
    %926 = vsyncpa [#allocation3], 1
    %927 = vsyncpa [#allocation6], 1
    %928 = vsyncpa [#allocation9], 1
    %929 = vsyncpa [#allocation4], 1

</llo_original>
